<compile_context>
chip_gen: v5e
topology: v5e:2x2
jax: 0.10.0
libtpu: 0.0.40
codegen_flags: <defaults>
</compile_context>

<pallas_src>
import functools

import jax
import jax.numpy as jnp
from jax.experimental import pallas as pl
from jax.experimental.pallas import tpu as pltpu

LN_EPS = 1e-6      # ConvNeXt LayerNorm eps
PATCH = 4          # ConvNeXt stem: 4x4 conv, stride 4
C_STEM = 128       # stem width (stand-in for ConvNeXt trunk width)
FEAT = 256         # self.cnn.classifier[2] = nn.Linear(num_ftrs, 256)
NUM_CLASSES = 4    # self.classifier = nn.Linear(256 * 2, 4)


def _layernorm(x, gamma, beta):
    mu = jnp.mean(x, axis=-1, keepdims=True)
    var = jnp.mean((x - mu) ** 2, axis=-1, keepdims=True)
    return (x - mu) * jax.lax.rsqrt(var + LN_EPS) * gamma + beta


# ---------------------------------------------------------------------------
# Single fused kernel: both siamese branches + folded classifier.
# ---------------------------------------------------------------------------
def fused_kernel(patches_ref,        # [2B*P, kh*kw]
                 w_stem_ref,         # [kh*kw, C_STEM] (grayscale-folded)
                 vecs_ref,           # [8, C_STEM]: b_stem, g1, bta1, g2, bta2
                 a_ref,              # [2, C_STEM, 4]: folded W_head@Wv@Wc per branch
                 btot_ref,           # [1, 4]: folded total bias
                 out_ref,            # [B, 4]
                 *, batch, patches_per_img):
    vecs = vecs_ref[...]
    b_stem = vecs[0:1, :]
    g1, bta1 = vecs[1:2, :], vecs[2:3, :]
    g2, bta2 = vecs[3:4, :], vecs[4:5, :]

    # Patchify "conv" as a matmul over im2col patches: [2B*P, K] @ [K, C1]
    h = jnp.dot(patches_ref[...], w_stem_ref[...],
                preferred_element_type=jnp.float32) + b_stem
    # Stem LayerNorm over channels (per spatial position)
    h = _layernorm(h, g1, bta1)

    # Global average pool over patch positions, branch axis kept leading:
    # [2B*P, C] -> [2, B, P, C] -> mean over P -> [2, B, C]
    pooled = jnp.mean(h.reshape(2, batch, patches_per_img, C_STEM), axis=2)

    # classifier[0] LayerNorm.  Everything after it (classifier[2] Linear,
    # Attention.value — softmax over a size-1 axis == 1.0 — and the final
    # Linear(512, 4)) is a pure linear chain pre-folded into a_ref / btot_ref.
    pooled = _layernorm(pooled, g2, bta2)

    out = jnp.dot(pooled[0], a_ref[0], preferred_element_type=jnp.float32)
    out = out + jnp.dot(pooled[1], a_ref[1], preferred_element_type=jnp.float32)
    out_ref[...] = out + btot_ref[...]


# ---------------------------------------------------------------------------
# Wrappers / glue
# ---------------------------------------------------------------------------
def _vmem_specs(n):
    return [pl.BlockSpec(memory_space=pltpu.MemorySpace.VMEM) for _ in range(n)]


def _extract_patches_gray(x):
    """x: [N, 1, H, W] -> [N*P, PATCH*PATCH] in (kh, kw) order."""
    N, C, H, W = x.shape
    ph, pw = H // PATCH, W // PATCH
    p = x.reshape(N, ph, PATCH, pw, PATCH)
    p = p.transpose(0, 1, 3, 2, 4)                  # [N, ph, pw, kh, kw]
    return p.reshape(N * ph * pw, PATCH * PATCH), ph * pw


def prepare_params(raw):
    """One-time weight preparation (grayscale fold, linear-chain fold, packing)."""
    kc = PATCH * PATCH
    # Fold x.repeat(1, 3, 1, 1) into the stem weight: exact for grayscale
    # input repeated across 3 channels (rows of w_stem are (c, kh, kw)-flat).
    w_stem_eff = (raw['w_stem'][0:kc]
                  + raw['w_stem'][kc:2 * kc]
                  + raw['w_stem'][2 * kc:3 * kc])             # [16, C_STEM]

    # Fold classifier[2] Linear -> Attention.value -> final Linear(512, 4).
    wc1 = raw['wc'][:FEAT, :]                                 # [256, 4]
    wc2 = raw['wc'][FEAT:, :]                                 # [256, 4]
    w_hv = raw['w_head'] @ raw['wv']                          # [C_STEM, 256]
    a1 = w_hv @ wc1                                           # [C_STEM, 4]
    a2 = w_hv @ wc2                                           # [C_STEM, 4]
    b_v = raw['b_head'] @ raw['wv'] + raw['bv']               # [1, 256]
    b_tot = b_v @ wc1 + b_v @ wc2 + raw['bc']                 # [1, 4]

    # Pack the five (1, C_STEM) vectors into one sublane-aligned [8, C_STEM].
    pad = jnp.zeros((3, C_STEM), jnp.float32)
    vecs = jnp.concatenate(
        [raw['b_stem'], raw['g1'], raw['bta1'], raw['g2'], raw['bta2'], pad],
        axis=0)                                               # [8, C_STEM]

    return {
        'w_stem_eff': w_stem_eff,
        'vecs': vecs,
        'A': jnp.stack([a1, a2], axis=0),                     # [2, C_STEM, 4]
        'b_tot': b_tot,                                       # [1, 4]
    }


def siamese_forward(x1, x2, prep):
    """x1, x2: [B, 1, H, W] float32 -> logits [B, 4]."""
    B = x1.shape[0]
    # Batch both siamese branches into one kernel call (weights are shared);
    # branch index ends up leading after the in-kernel GAP reshape.
    x = jnp.concatenate([x1, x2], axis=0)           # [2B, 1, H, W]
    patches, P = _extract_patches_gray(x)           # [2B*P, 16]

    args = (patches, prep['w_stem_eff'], prep['vecs'], prep['A'], prep['b_tot'])
    kernel = functools.partial(fused_kernel, batch=B, patches_per_img=P)
    return pl.pallas_call(
        kernel,
        out_shape=jax.ShapeDtypeStruct((B, NUM_CLASSES), jnp.float32),
        in_specs=_vmem_specs(len(args)),
        out_specs=pl.BlockSpec(memory_space=pltpu.MemorySpace.VMEM),
        compiler_params=pltpu.CompilerParams(
            # Let XLA fuse the tiny im2col producer into the patches operand.
            allow_input_fusion=[True, False, False, False, False]),
    )(*args)


def init_params(key):
    ks = jax.random.split(key, 11)
    w = lambda k, shape, s: jax.random.normal(k, shape, jnp.float32) * s
    Kp = 3 * PATCH * PATCH
    return {
        'w_stem': w(ks[0], (Kp, C_STEM), 0.10),
        'b_stem': jnp.zeros((1, C_STEM), jnp.float32),
        'g1':     jnp.ones((1, C_STEM), jnp.float32),
        'bta1':   jnp.zeros((1, C_STEM), jnp.float32),
        'g2':     jnp.ones((1, C_STEM), jnp.float32),
        'bta2':   jnp.zeros((1, C_STEM), jnp.float32),
        'w_head': w(ks[1], (C_STEM, FEAT), 0.05),
        'b_head': w(ks[2], (1, FEAT), 0.01),
        # Attention.query / Attention.key exist in the module's state but are
        # mathematically inert in forward (softmax over a size-1 axis == 1.0),
        # so they are kept for interface fidelity and never used.
        'wq':     w(ks[3], (FEAT, FEAT), 0.05),
        'bq':     w(ks[4], (1, FEAT), 0.01),
        'wk':     w(ks[5], (FEAT, FEAT), 0.05),
        'bk':     w(ks[6], (1, FEAT), 0.01),
        'wv':     w(ks[7], (FEAT, FEAT), 0.05),
        'bv':     w(ks[8], (1, FEAT), 0.01),
        'wc':     w(ks[9], (2 * FEAT, NUM_CLASSES), 0.05),
        'bc':     w(ks[10], (1, NUM_CLASSES), 0.01),
    }


if __name__ == "__main__":
    key = jax.random.PRNGKey(0)
    kx1, kx2, kp = jax.random.split(key, 3)
    B, H, W = 2, 16, 16
    x1 = jax.random.normal(kx1, (B, 1, H, W), jnp.float32)
    x2 = jax.random.normal(kx2, (B, 1, H, W), jnp.float32)

    params = init_params(kp)
    prep = prepare_params(params)      # one-time weight prep (not per call)

    out = jax.jit(siamese_forward)(x1, x2, prep)
    out = jax.block_until_ready(out)
    assert out.shape == (B, NUM_CLASSES) and out.dtype == jnp.float32
    assert bool(jnp.all(jnp.isfinite(out)))
    print("KERNEL_OK")
</pallas_src>

<mosaic_0001>
module attributes {stable_mosaic.version = 11 : i64} {
  func.func @fused_kernel(%arg0: memref<64x16xf32, #tpu.memory_space<vmem>>, %arg1: memref<16x128xf32, #tpu.memory_space<vmem>>, %arg2: memref<8x128xf32, #tpu.memory_space<vmem>>, %arg3: memref<2x128x4xf32, #tpu.memory_space<vmem>>, %arg4: memref<1x4xf32, #tpu.memory_space<vmem>>, %arg5: memref<2x4xf32, #tpu.memory_space<vmem>>) attributes {dimension_semantics = [], scalar_prefetch = 0 : i64, scratch_operands = 0 : i64, tpu.core_type = #tpu.core_type<tc>} {
    %c0 = arith.constant 0 : index
    %c0_0 = arith.constant 0 : index
    %0 = vector.load %arg2[%c0, %c0_0] : memref<8x128xf32, #tpu.memory_space<vmem>>, vector<8x128xf32>
    %1 = vector.extract_strided_slice %0 {offsets = [0, 0], sizes = [1, 128], strides = [1, 1]} : vector<8x128xf32> to vector<1x128xf32>
    %2 = vector.extract_strided_slice %0 {offsets = [1, 0], sizes = [1, 128], strides = [1, 1]} : vector<8x128xf32> to vector<1x128xf32>
    %3 = vector.extract_strided_slice %0 {offsets = [2, 0], sizes = [1, 128], strides = [1, 1]} : vector<8x128xf32> to vector<1x128xf32>
    %4 = vector.extract_strided_slice %0 {offsets = [3, 0], sizes = [1, 128], strides = [1, 1]} : vector<8x128xf32> to vector<1x128xf32>
    %5 = vector.extract_strided_slice %0 {offsets = [4, 0], sizes = [1, 128], strides = [1, 1]} : vector<8x128xf32> to vector<1x128xf32>
    %c0_1 = arith.constant 0 : index
    %c0_2 = arith.constant 0 : index
    %6 = vector.load %arg0[%c0_1, %c0_2] : memref<64x16xf32, #tpu.memory_space<vmem>>, vector<64x16xf32>
    %c0_3 = arith.constant 0 : index
    %c0_4 = arith.constant 0 : index
    %7 = vector.load %arg1[%c0_3, %c0_4] : memref<16x128xf32, #tpu.memory_space<vmem>>, vector<16x128xf32>
    %cst = arith.constant dense<0.000000e+00> : vector<64x128xf32>
    %8 = tpu.matmul %6, %7, %cst {dimension_numbers = #tpu.dot_dimension_numbers<[1], [0], [0], [1], [0, 0, 1, 1], [], []>} : vector<64x16xf32>, vector<16x128xf32>, vector<64x128xf32> -> vector<64x128xf32>
    %9 = vector.broadcast %1 : vector<1x128xf32> to vector<64x128xf32>
    %10 = arith.addf %8, %9 : vector<64x128xf32>
    %cst_5 = arith.constant dense<0.000000e+00> : vector<64xf32>
    %11 = vector.multi_reduction <add>, %10, %cst_5 [1] : vector<64x128xf32> to vector<64xf32>
    %12 = vector.shape_cast %11 : vector<64xf32> to vector<64x1xf32>
    %cst_6 = arith.constant 1.280000e+02 : f32
    %13 = vector.broadcast %cst_6 : f32 to vector<64x1xf32>
    %14 = arith.divf %12, %13 : vector<64x1xf32>
    %15 = vector.broadcast %14 : vector<64x1xf32> to vector<64x128xf32>
    %16 = arith.subf %10, %15 : vector<64x128xf32>
    %17 = arith.mulf %16, %16 : vector<64x128xf32>
    %cst_7 = arith.constant dense<0.000000e+00> : vector<64xf32>
    %18 = vector.multi_reduction <add>, %17, %cst_7 [1] : vector<64x128xf32> to vector<64xf32>
    %19 = vector.shape_cast %18 : vector<64xf32> to vector<64x1xf32>
    %cst_8 = arith.constant 1.280000e+02 : f32
    %20 = vector.broadcast %cst_8 : f32 to vector<64x1xf32>
    %21 = arith.divf %19, %20 : vector<64x1xf32>
    %22 = vector.broadcast %14 : vector<64x1xf32> to vector<64x128xf32>
    %23 = arith.subf %10, %22 : vector<64x128xf32>
    %cst_9 = arith.constant 9.99999997E-7 : f32
    %24 = vector.broadcast %cst_9 : f32 to vector<64x1xf32>
    %25 = arith.addf %21, %24 : vector<64x1xf32>
    %26 = math.rsqrt %25 : vector<64x1xf32>
    %27 = vector.broadcast %26 : vector<64x1xf32> to vector<64x128xf32>
    %28 = arith.mulf %23, %27 : vector<64x128xf32>
    %29 = vector.broadcast %2 : vector<1x128xf32> to vector<64x128xf32>
    %30 = arith.mulf %28, %29 : vector<64x128xf32>
    %31 = vector.broadcast %3 : vector<1x128xf32> to vector<64x128xf32>
    %32 = arith.addf %30, %31 : vector<64x128xf32>
    %33 = vector.shape_cast %32 : vector<64x128xf32> to vector<2x2x16x128xf32>
    %cst_10 = arith.constant dense<0.000000e+00> : vector<2x2x128xf32>
    %34 = vector.multi_reduction <add>, %33, %cst_10 [2] : vector<2x2x16x128xf32> to vector<2x2x128xf32>
    %cst_11 = arith.constant 1.600000e+01 : f32
    %35 = vector.broadcast %cst_11 : f32 to vector<2x2x128xf32>
    %36 = arith.divf %34, %35 : vector<2x2x128xf32>
    %cst_12 = arith.constant dense<0.000000e+00> : vector<2x2xf32>
    %37 = vector.multi_reduction <add>, %36, %cst_12 [2] : vector<2x2x128xf32> to vector<2x2xf32>
    %38 = vector.shape_cast %37 : vector<2x2xf32> to vector<2x2x1xf32>
    %cst_13 = arith.constant 1.280000e+02 : f32
    %39 = vector.broadcast %cst_13 : f32 to vector<2x2x1xf32>
    %40 = arith.divf %38, %39 : vector<2x2x1xf32>
    %41 = vector.broadcast %40 : vector<2x2x1xf32> to vector<2x2x128xf32>
    %42 = arith.subf %36, %41 : vector<2x2x128xf32>
    %43 = arith.mulf %42, %42 : vector<2x2x128xf32>
    %cst_14 = arith.constant dense<0.000000e+00> : vector<2x2xf32>
    %44 = vector.multi_reduction <add>, %43, %cst_14 [2] : vector<2x2x128xf32> to vector<2x2xf32>
    %45 = vector.shape_cast %44 : vector<2x2xf32> to vector<2x2x1xf32>
    %cst_15 = arith.constant 1.280000e+02 : f32
    %46 = vector.broadcast %cst_15 : f32 to vector<2x2x1xf32>
    %47 = arith.divf %45, %46 : vector<2x2x1xf32>
    %48 = vector.broadcast %40 : vector<2x2x1xf32> to vector<2x2x128xf32>
    %49 = arith.subf %36, %48 : vector<2x2x128xf32>
    %cst_16 = arith.constant 9.99999997E-7 : f32
    %50 = vector.broadcast %cst_16 : f32 to vector<2x2x1xf32>
    %51 = arith.addf %47, %50 : vector<2x2x1xf32>
    %52 = math.rsqrt %51 : vector<2x2x1xf32>
    %53 = vector.broadcast %52 : vector<2x2x1xf32> to vector<2x2x128xf32>
    %54 = arith.mulf %49, %53 : vector<2x2x128xf32>
    %55 = vector.shape_cast %4 : vector<1x128xf32> to vector<1x1x128xf32>
    %56 = vector.broadcast %55 : vector<1x1x128xf32> to vector<2x2x128xf32>
    %57 = arith.mulf %54, %56 : vector<2x2x128xf32>
    %58 = vector.shape_cast %5 : vector<1x128xf32> to vector<1x1x128xf32>
    %59 = vector.broadcast %58 : vector<1x1x128xf32> to vector<2x2x128xf32>
    %60 = arith.addf %57, %59 : vector<2x2x128xf32>
    %61 = vector.extract_strided_slice %60 {offsets = [0, 0, 0], sizes = [1, 2, 128], strides = [1, 1, 1]} : vector<2x2x128xf32> to vector<1x2x128xf32>
    %62 = vector.shape_cast %61 : vector<1x2x128xf32> to vector<2x128xf32>
    %c0_17 = arith.constant 0 : index
    %c0_18 = arith.constant 0 : index
    %c0_19 = arith.constant 0 : index
    %63 = vector.load %arg3[%c0_17, %c0_18, %c0_19] : memref<2x128x4xf32, #tpu.memory_space<vmem>>, vector<1x128x4xf32>
    %64 = vector.shape_cast %63 : vector<1x128x4xf32> to vector<128x4xf32>
    %cst_20 = arith.constant dense<0.000000e+00> : vector<2x4xf32>
    %65 = tpu.matmul %62, %64, %cst_20 {dimension_numbers = #tpu.dot_dimension_numbers<[1], [0], [0], [1], [0, 0, 1, 1], [], []>} : vector<2x128xf32>, vector<128x4xf32>, vector<2x4xf32> -> vector<2x4xf32>
    %66 = vector.extract_strided_slice %60 {offsets = [1, 0, 0], sizes = [1, 2, 128], strides = [1, 1, 1]} : vector<2x2x128xf32> to vector<1x2x128xf32>
    %67 = vector.shape_cast %66 : vector<1x2x128xf32> to vector<2x128xf32>
    %c1 = arith.constant 1 : index
    %c0_21 = arith.constant 0 : index
    %c0_22 = arith.constant 0 : index
    %68 = vector.load %arg3[%c1, %c0_21, %c0_22] : memref<2x128x4xf32, #tpu.memory_space<vmem>>, vector<1x128x4xf32>
    %69 = vector.shape_cast %68 : vector<1x128x4xf32> to vector<128x4xf32>
    %cst_23 = arith.constant dense<0.000000e+00> : vector<2x4xf32>
    %70 = tpu.matmul %67, %69, %cst_23 {dimension_numbers = #tpu.dot_dimension_numbers<[1], [0], [0], [1], [0, 0, 1, 1], [], []>} : vector<2x128xf32>, vector<128x4xf32>, vector<2x4xf32> -> vector<2x4xf32>
    %71 = arith.addf %65, %70 : vector<2x4xf32>
    %c0_24 = arith.constant 0 : index
    %c0_25 = arith.constant 0 : index
    %72 = vector.load %arg4[%c0_24, %c0_25] : memref<1x4xf32, #tpu.memory_space<vmem>>, vector<1x4xf32>
    %73 = vector.broadcast %72 : vector<1x4xf32> to vector<2x4xf32>
    %74 = arith.addf %71, %73 : vector<2x4xf32>
    %c0_26 = arith.constant 0 : index
    %c0_27 = arith.constant 0 : index
    %75 = vector.load %arg5[%c0_26, %c0_27] : memref<2x4xf32, #tpu.memory_space<vmem>>, vector<2x4xf32>
    tpu.vector_store %arg5[%c0_26, %c0_27], %74 {strides = array<i32>} : memref<2x4xf32, #tpu.memory_space<vmem>>, vector<2x4xf32>,
    return
  }
}

</mosaic_0001>

<llo_original>
// kernel: siamese_forward.1
$region0: #{siamese_forward.1}
  #allocation0 [shape = 'u32[]', space=smem, size = 0x4, offset = 0x4, fixed_abs, tag = 'smem constant byte address 0x4 - core index']
  #allocation1 [shape = 'u32[72,128]{1,0:T(1,128)}', space=vmem, size = 0x9000, scoped, tag = 'internal scratch']
  %s0 = inlined_call_operand.vmem [shape: f32[64,16], index: 0, kind: input, shape index: {}]
  %s1 = inlined_call_operand.vmem [shape: f32[16,128], index: 1, kind: input, shape index: {}]
  %s2 = inlined_call_operand.vmem [shape: f32[8,128], index: 2, kind: input, shape index: {}]
  %s3 = inlined_call_operand.vmem [shape: f32[2,128,4], index: 3, kind: input, shape index: {}]
  %s4 = inlined_call_operand.vmem [shape: f32[1,4], index: 4, kind: input, shape index: {}]
  %s5 = inlined_call_operand.hbm [shape: f32[2,4], index: 5, kind: output, shape index: {}]
  %s6 = sld [smem:[#allocation0]]
  $region30: #{siamese_forward.1} parent=0
    _
  %s8 = ssub.s32 1, %s6
  %s9 = scalar_select 0, %s8, %s6
  $region1: #{siamese_forward.1} parent=0
    #allocation2 [shape = 'u8[1024]{0}', space=vmem, size = 0x400, scoped, tag = 'output window, operand 0, single buffered']
    #allocation3 [shape = 's32[1]{0}', space=sflag, size = 0x4, scoped, tag = 'scoped memory for siamese_forward.1']
    %10 = vsyncpa [#allocation3], 0
    // Predicated region
    $region2: #{siamese_forward.1} parent=1 // pred_check
      _
    $region3: #{siamese_forward.1} parent=1 // pred_check_branch
      %12 = sbr.rel (0) target = $region5
    $region4: #{siamese_forward.1} parent=1 // pred_region
      _
    $region5: #{siamese_forward.1} parent=1 // pred_fallthru
      _
    // Predicated region
    $region6: #{siamese_forward.1} parent=1 // pred_check
      _
    $region7: #{siamese_forward.1} parent=1 // pred_check_branch
      %14 = sbr.rel (0) target = $region9
    $region8: #{siamese_forward.1} parent=1 // pred_region
      _
    $region9: #{siamese_forward.1} parent=1 // pred_fallthru
      _
    // Predicated region
    $region10: #{siamese_forward.1} parent=1 // pred_check
      _
    $region11: #{siamese_forward.1} parent=1 // pred_check_branch
      %16 = sbr.rel (0) target = $region13
    $region12: #{siamese_forward.1} parent=1 // pred_region
      _
    $region13: #{siamese_forward.1} parent=1 // pred_fallthru
      _
    // Predicated region
    $region14: #{siamese_forward.1} parent=1 // pred_check
      _
    $region15: #{siamese_forward.1} parent=1 // pred_check_branch
      %18 = sbr.rel (0) target = $region17
    $region16: #{siamese_forward.1} parent=1 // pred_region
      _
    $region17: #{siamese_forward.1} parent=1 // pred_fallthru
      _
    // Predicated region
    $region18: #{siamese_forward.1} parent=1 // pred_check
      _
    $region19: #{siamese_forward.1} parent=1 // pred_check_branch
      %20 = sbr.rel (0) target = $region21
    $region20: #{siamese_forward.1} parent=1 // pred_region
      _
    $region21: #{siamese_forward.1} parent=1 // pred_fallthru
      _
    %v21 = vld [vmem:[%s2] sm:$0xff]
    %v22 = vld [vmem:[%s0] sm:$0xff]
    %v23 = vld [vmem:[%s0 + $0x8] sm:$0xff]
    %v24 = vld [vmem:[%s0 + $0x10] sm:$0xff]
    %v25 = vld [vmem:[%s0 + $0x18] sm:$0xff]
    %v26 = vld [vmem:[%s0 + $0x20] sm:$0xff]
    %v27 = vld [vmem:[%s0 + $0x28] sm:$0xff]
    %v28 = vld [vmem:[%s0 + $0x30] sm:$0xff]
    %v29 = vld [vmem:[%s0 + $0x38] sm:$0xff]
    %v30 = vld [vmem:[%s1] sm:$0xff]
    %v31 = vld [vmem:[%s1 + $0x8] sm:$0xff]
    %v32 = vperm.slane %v21, 0
    %vm33 = vcmask 130048
    %v35 = vsel %vm33, %v22, 0
    %v38 = vsel %vm33, %v23, 0
    %v41 = vsel %vm33, %v24, 0
    %v44 = vsel %vm33, %v25, 0
    %v47 = vsel %vm33, %v26, 0
    %v50 = vsel %vm33, %v27, 0
    %v53 = vsel %vm33, %v28, 0
    %v56 = vsel %vm33, %v29, 0
    %58 = vmatpush.msra.mxu0 0.0
    %59 = vmatpush.msra.mxu0 0.0
    %60 = vmatpush.msra.mxu0 0.0
    %61 = vmatpush.msra.mxu0 0.0
    %62 = vmatpush.msra.mxu0 0.0
    %63 = vmatpush.msra.mxu0 0.0
    %64 = vmatpush.msra.mxu0 0.0
    %65 = vmatpush.msra.mxu0 0.0
    %66 = vmatpush.msra.mxu0 0.0
    %67 = vmatpush.msra.mxu0 0.0
    %68 = vmatpush.msra.mxu0 0.0
    %69 = vmatpush.msra.mxu0 0.0
    %70 = vmatpush.msra.mxu0 0.0
    %71 = vmatpush.msra.mxu0 0.0
    %72 = vmatpush.msra.mxu0 %v31
    %73 = vmatpush.msra.mxu0 %v30
    %74 = vmatmul.f32.gmra.mxu0 %v35
    %v75 = vpop.f32.mrf.mxu0
    %v76 = vadd.f32 %v32, %v75
    %77 = vmatmul.f32.gmra.mxu0 %v38
    %v78 = vpop.f32.mrf.mxu0
    %v79 = vadd.f32 %v32, %v78
    %80 = vmatmul.f32.gmra.mxu0 %v41
    %v81 = vpop.f32.mrf.mxu0
    %v82 = vadd.f32 %v32, %v81
    %83 = vmatmul.f32.gmra.mxu0 %v44
    %v84 = vpop.f32.mrf.mxu0
    %v85 = vadd.f32 %v32, %v84
    %86 = vmatmul.f32.gmra.mxu0 %v47
    %v87 = vpop.f32.mrf.mxu0
    %v88 = vadd.f32 %v32, %v87
    %89 = vmatmul.f32.gmra.mxu0 %v50
    %v90 = vpop.f32.mrf.mxu0
    %v91 = vadd.f32 %v32, %v90
    %92 = vmatmul.f32.gmra.mxu0 %v53
    %v93 = vpop.f32.mrf.mxu0
    %v94 = vadd.f32 %v32, %v93
    %95 = vmatmul.f32.gmra.mxu0 %v56
    %v96 = vpop.f32.mrf.mxu0
    %v97 = vadd.f32 %v32, %v96
    %98 = vdwg.mxu0
    %99 = vadd.xlane.f32.xlu0 %v76
    %v100 = vpop.xlane.xlu0 %99
    %101 = vadd.xlane.f32.xlu0 %v79
    %v102 = vpop.xlane.xlu0 %101
    %103 = vadd.xlane.f32.xlu0 %v82
    %v104 = vpop.xlane.xlu0 %103
    %105 = vadd.xlane.f32.xlu0 %v85
    %v106 = vpop.xlane.xlu0 %105
    %107 = vadd.xlane.f32.xlu0 %v88
    %v108 = vpop.xlane.xlu0 %107
    %109 = vadd.xlane.f32.xlu0 %v91
    %v110 = vpop.xlane.xlu0 %109
    %111 = vadd.xlane.f32.xlu0 %v94
    %v112 = vpop.xlane.xlu0 %111
    %113 = vadd.xlane.f32.xlu0 %v97
    %v114 = vpop.xlane.xlu0 %113
    %v115 = vrcp.pop 128.0
    %v116 = vmul.f32 128.0, %v115
    %v117 = vsub.f32 1.0, %v116
    %v118 = vmul.f32 %v115, %v117
    %v119 = vadd.f32 %v115, %v118
    %vm120 = vweird.f32 %v115
    %v121 = vsel %vm120, %v115, %v119
    %v122 = vmul.f32 %v100, %v121
    %v123 = vmul.f32 %v102, %v121
    %v124 = vmul.f32 %v104, %v121
    %v125 = vmul.f32 %v106, %v121
    %v126 = vmul.f32 %v108, %v121
    %v127 = vmul.f32 %v110, %v121
    %v128 = vmul.f32 %v112, %v121
    %v129 = vmul.f32 %v114, %v121
    %v130 = vsub.f32 %v76, %v122
    %v131 = vsub.f32 %v79, %v123
    %v132 = vsub.f32 %v82, %v124
    %v133 = vsub.f32 %v85, %v125
    %v134 = vsub.f32 %v88, %v126
    %v135 = vsub.f32 %v91, %v127
    %v136 = vsub.f32 %v94, %v128
    %v137 = vsub.f32 %v97, %v129
    %v138 = vmul.f32 %v130, %v130
    %v139 = vmul.f32 %v131, %v131
    %v140 = vmul.f32 %v132, %v132
    %v141 = vmul.f32 %v133, %v133
    %v142 = vmul.f32 %v134, %v134
    %v143 = vmul.f32 %v135, %v135
    %v144 = vmul.f32 %v136, %v136
    %v145 = vmul.f32 %v137, %v137
    %146 = vadd.xlane.f32.xlu0 %v138
    %v147 = vpop.xlane.xlu0 %146
    %148 = vadd.xlane.f32.xlu0 %v139
    %v149 = vpop.xlane.xlu0 %148
    %150 = vadd.xlane.f32.xlu0 %v140
    %v151 = vpop.xlane.xlu0 %150
    %152 = vadd.xlane.f32.xlu0 %v141
    %v153 = vpop.xlane.xlu0 %152
    %154 = vadd.xlane.f32.xlu0 %v142
    %v155 = vpop.xlane.xlu0 %154
    %156 = vadd.xlane.f32.xlu0 %v143
    %v157 = vpop.xlane.xlu0 %156
    %158 = vadd.xlane.f32.xlu0 %v144
    %v159 = vpop.xlane.xlu0 %158
    %160 = vadd.xlane.f32.xlu0 %v145
    %v161 = vpop.xlane.xlu0 %160
    %v162 = vmul.f32 %v147, %v121
    %v163 = vmul.f32 %v149, %v121
    %v164 = vmul.f32 %v151, %v121
    %v165 = vmul.f32 %v153, %v121
    %v166 = vmul.f32 %v155, %v121
    %v167 = vmul.f32 %v157, %v121
    %v168 = vmul.f32 %v159, %v121
    %v169 = vmul.f32 %v161, %v121
    %v170 = vadd.f32 %v162, 1e-06
    %v171 = vadd.f32 %v163, 1e-06
    %v172 = vadd.f32 %v164, 1e-06
    %v173 = vadd.f32 %v165, 1e-06
    %v174 = vadd.f32 %v166, 1e-06
    %v175 = vadd.f32 %v167, 1e-06
    %v176 = vadd.f32 %v168, 1e-06
    %v177 = vadd.f32 %v169, 1e-06
    %v178 = vrsqrt.pop %v170
    %v179 = vmul.f32 %v178, %v170
    %v180 = vmul.f32 %v179, %v178
    %v181 = vmul.f32 0.5, %v180
    %v182 = vsub.f32 1.5, %v181
    %v183 = vmul.f32 %v178, %v182
    %vm184 = vweird.f32 %v170
    %vm185 = vweird.f32 %v178
    %vm186 = vmor %vm184, %vm185
    %v187 = vsel %vm186, %v178, %v183
    %v188 = vrsqrt.pop %v171
    %v189 = vmul.f32 %v188, %v171
    %v190 = vmul.f32 %v189, %v188
    %v191 = vmul.f32 0.5, %v190
    %v192 = vsub.f32 1.5, %v191
    %v193 = vmul.f32 %v188, %v192
    %vm194 = vweird.f32 %v171
    %vm195 = vweird.f32 %v188
    %vm196 = vmor %vm194, %vm195
    %v197 = vsel %vm196, %v188, %v193
    %v198 = vrsqrt.pop %v172
    %v199 = vmul.f32 %v198, %v172
    %v200 = vmul.f32 %v199, %v198
    %v201 = vmul.f32 0.5, %v200
    %v202 = vsub.f32 1.5, %v201
    %v203 = vmul.f32 %v198, %v202
    %vm204 = vweird.f32 %v172
    %vm205 = vweird.f32 %v198
    %vm206 = vmor %vm204, %vm205
    %v207 = vsel %vm206, %v198, %v203
    %v208 = vrsqrt.pop %v173
    %v209 = vmul.f32 %v208, %v173
    %v210 = vmul.f32 %v209, %v208
    %v211 = vmul.f32 0.5, %v210
    %v212 = vsub.f32 1.5, %v211
    %v213 = vmul.f32 %v208, %v212
    %vm214 = vweird.f32 %v173
    %vm215 = vweird.f32 %v208
    %vm216 = vmor %vm214, %vm215
    %v217 = vsel %vm216, %v208, %v213
    %v218 = vrsqrt.pop %v174
    %v219 = vmul.f32 %v218, %v174
    %v220 = vmul.f32 %v219, %v218
    %v221 = vmul.f32 0.5, %v220
    %v222 = vsub.f32 1.5, %v221
    %v223 = vmul.f32 %v218, %v222
    %vm224 = vweird.f32 %v174
    %vm225 = vweird.f32 %v218
    %vm226 = vmor %vm224, %vm225
    %v227 = vsel %vm226, %v218, %v223
    %v228 = vrsqrt.pop %v175
    %v229 = vmul.f32 %v228, %v175
    %v230 = vmul.f32 %v229, %v228
    %v231 = vmul.f32 0.5, %v230
    %v232 = vsub.f32 1.5, %v231
    %v233 = vmul.f32 %v228, %v232
    %vm234 = vweird.f32 %v175
    %vm235 = vweird.f32 %v228
    %vm236 = vmor %vm234, %vm235
    %v237 = vsel %vm236, %v228, %v233
    %v238 = vrsqrt.pop %v176
    %v239 = vmul.f32 %v238, %v176
    %v240 = vmul.f32 %v239, %v238
    %v241 = vmul.f32 0.5, %v240
    %v242 = vsub.f32 1.5, %v241
    %v243 = vmul.f32 %v238, %v242
    %vm244 = vweird.f32 %v176
    %vm245 = vweird.f32 %v238
    %vm246 = vmor %vm244, %vm245
    %v247 = vsel %vm246, %v238, %v243
    %v248 = vrsqrt.pop %v177
    %v249 = vmul.f32 %v248, %v177
    %v250 = vmul.f32 %v249, %v248
    %v251 = vmul.f32 0.5, %v250
    %v252 = vsub.f32 1.5, %v251
    %v253 = vmul.f32 %v248, %v252
    %vm254 = vweird.f32 %v177
    %vm255 = vweird.f32 %v248
    %vm256 = vmor %vm254, %vm255
    %v257 = vsel %vm256, %v248, %v253
    %v258 = vmul.f32 %v130, %v187
    %v259 = vmul.f32 %v131, %v197
    %v260 = vmul.f32 %v132, %v207
    %v261 = vmul.f32 %v133, %v217
    %v262 = vmul.f32 %v134, %v227
    %v263 = vmul.f32 %v135, %v237
    %v264 = vmul.f32 %v136, %v247
    %v265 = vmul.f32 %v137, %v257
    %v266 = vperm.slane %v21, 1
    %v267 = vmul.f32 %v258, %v266
    %v268 = vmul.f32 %v259, %v266
    %v269 = vmul.f32 %v260, %v266
    %v270 = vmul.f32 %v261, %v266
    %v271 = vmul.f32 %v262, %v266
    %v272 = vmul.f32 %v263, %v266
    %v273 = vmul.f32 %v264, %v266
    %v274 = vmul.f32 %v265, %v266
    %v275 = vperm.slane %v21, 2
    %v276 = vadd.f32 %v267, %v275
    %v277 = vadd.f32 %v268, %v275
    %v278 = vadd.f32 %v269, %v275
    %v279 = vadd.f32 %v270, %v275
    %v280 = vadd.f32 %v271, %v275
    %v281 = vadd.f32 %v272, %v275
    %v282 = vadd.f32 %v273, %v275
    %v283 = vadd.f32 %v274, %v275
    %v284 = vadd.f32 %v276, %v277
    %v285 = vrot.slane %v284, 4
    %v286 = vadd.f32 %v284, %v285
    %v287 = vrot.slane %v286, 2
    %v288 = vadd.f32 %v286, %v287
    %v289 = vrot.slane %v288, 1
    %v290 = vadd.f32 %v288, %v289
    %v291 = vadd.f32 %v278, %v279
    %v292 = vrot.slane %v291, 4
    %v293 = vadd.f32 %v291, %v292
    %v294 = vrot.slane %v293, 2
    %v295 = vadd.f32 %v293, %v294
    %v296 = vrot.slane %v295, 1
    %v297 = vadd.f32 %v295, %v296
    %v298 = vadd.f32 %v280, %v281
    %v299 = vrot.slane %v298, 4
    %v300 = vadd.f32 %v298, %v299
    %v301 = vrot.slane %v300, 2
    %v302 = vadd.f32 %v300, %v301
    %v303 = vrot.slane %v302, 1
    %v304 = vadd.f32 %v302, %v303
    %v305 = vadd.f32 %v282, %v283
    %v306 = vrot.slane %v305, 4
    %v307 = vadd.f32 %v305, %v306
    %v308 = vrot.slane %v307, 2
    %v309 = vadd.f32 %v307, %v308
    %v310 = vrot.slane %v309, 1
    %v311 = vadd.f32 %v309, %v310
    %v312 = vrcp.pop 16.0
    %v313 = vmul.f32 16.0, %v312
    %v314 = vsub.f32 1.0, %v313
    %v315 = vmul.f32 %v312, %v314
    %v316 = vadd.f32 %v312, %v315
    %vm317 = vweird.f32 %v312
    %v318 = vsel %vm317, %v312, %v316
    %v319 = vmul.f32 %v290, %v318
    %v320 = vmul.f32 %v297, %v318
    %v321 = vmul.f32 %v304, %v318
    %v322 = vmul.f32 %v311, %v318
    %vm327 = vcmask 1041409
    %v328 = vsel %vm327, %v320, %v319
    %v329 = vsel %vm327, %v322, %v321
    %vm332 = vcmask 1041408
    %v333 = vsel %vm332, %v328, 0.0
    %334 = vadd.xlane.f32.xlu0 %v333
    %v335 = vpop.xlane.xlu0 %334
    %v336 = vsel %vm332, %v329, 0.0
    %337 = vadd.xlane.f32.xlu0 %v336
    %v338 = vpop.xlane.xlu0 %337
    %v339 = vmul.f32 %v335, %v121
    %v340 = vmul.f32 %v338, %v121
    %v343 = vrot.slane %v339, 1
    %v344 = vrot.slane %v340, 1
    %v349 = vsub.f32 %v319, %v339
    %v350 = vsub.f32 %v320, %v343
    %v351 = vsub.f32 %v321, %v340
    %v352 = vsub.f32 %v322, %v344
    %v353 = vmul.f32 %v349, %v349
    %v354 = vmul.f32 %v350, %v350
    %v355 = vmul.f32 %v351, %v351
    %v356 = vmul.f32 %v352, %v352
    %v361 = vrot.slane %v354, 7
    %v362 = vsel %vm327, %v361, %v353
    %v363 = vrot.slane %v356, 7
    %v364 = vsel %vm327, %v363, %v355
    %v367 = vsel %vm332, %v362, 0.0
    %368 = vadd.xlane.f32.xlu0 %v367
    %v369 = vpop.xlane.xlu0 %368
    %v370 = vsel %vm332, %v364, 0.0
    %371 = vadd.xlane.f32.xlu0 %v370
    %v372 = vpop.xlane.xlu0 %371
    %v373 = vmul.f32 %v369, %v121
    %v374 = vmul.f32 %v372, %v121
    %v375 = vadd.f32 %v373, 1e-06
    %v376 = vadd.f32 %v374, 1e-06
    %v377 = vrsqrt.pop %v375
    %v378 = vmul.f32 %v377, %v375
    %v379 = vmul.f32 %v378, %v377
    %v380 = vmul.f32 0.5, %v379
    %v381 = vsub.f32 1.5, %v380
    %v382 = vmul.f32 %v377, %v381
    %vm383 = vweird.f32 %v375
    %vm384 = vweird.f32 %v377
    %vm385 = vmor %vm383, %vm384
    %v386 = vsel %vm385, %v377, %v382
    %v387 = vrsqrt.pop %v376
    %v388 = vmul.f32 %v387, %v376
    %v389 = vmul.f32 %v388, %v387
    %v390 = vmul.f32 0.5, %v389
    %v391 = vsub.f32 1.5, %v390
    %v392 = vmul.f32 %v387, %v391
    %vm393 = vweird.f32 %v376
    %vm394 = vweird.f32 %v387
    %vm395 = vmor %vm393, %vm394
    %v396 = vsel %vm395, %v387, %v392
    %v399 = vrot.slane %v386, 1
    %v400 = vrot.slane %v396, 1
    %v405 = vmul.f32 %v349, %v386
    %v406 = vmul.f32 %v350, %v399
    %v407 = vmul.f32 %v351, %v396
    %v408 = vmul.f32 %v352, %v400
    %v409 = vperm.slane %v21, 3
    %v410 = vmul.f32 %v405, %v409
    %v411 = vmul.f32 %v406, %v409
    %v412 = vmul.f32 %v407, %v409
    %v413 = vmul.f32 %v408, %v409
    %v414 = vperm.slane %v21, 4
    %v415 = vadd.f32 %v410, %v414
    %v416 = vadd.f32 %v411, %v414
    %v417 = vadd.f32 %v412, %v414
    %v418 = vadd.f32 %v413, %v414
    %v419 = vld [vmem:[%s3] sm:$0xff]
    %v420 = vld [vmem:[%s3 + $0x8] sm:$0xff]
    %v421 = vld [vmem:[%s3 + $0x10] sm:$0xff]
    %v422 = vld [vmem:[%s3 + $0x18] sm:$0xff]
    %v423 = vld [vmem:[%s3 + $0x20] sm:$0xff]
    %v424 = vld [vmem:[%s3 + $0x28] sm:$0xff]
    %v425 = vld [vmem:[%s3 + $0x30] sm:$0xff]
    %v426 = vld [vmem:[%s3 + $0x38] sm:$0xff]
    %v427 = vld [vmem:[%s3 + $0x40] sm:$0xff]
    %v428 = vld [vmem:[%s3 + $0x48] sm:$0xff]
    %v429 = vld [vmem:[%s3 + $0x50] sm:$0xff]
    %v430 = vld [vmem:[%s3 + $0x58] sm:$0xff]
    %v431 = vld [vmem:[%s3 + $0x60] sm:$0xff]
    %v432 = vld [vmem:[%s3 + $0x68] sm:$0xff]
    %v433 = vld [vmem:[%s3 + $0x70] sm:$0xff]
    %v434 = vld [vmem:[%s3 + $0x78] sm:$0xff]
    %s435 = scalar_lea.vmem %s3, 128
    %v436 = vld [vmem:[%s435] sm:$0xff]
    %v437 = vld [vmem:[%s435 + $0x8] sm:$0xff]
    %v438 = vld [vmem:[%s435 + $0x10] sm:$0xff]
    %v439 = vld [vmem:[%s435 + $0x18] sm:$0xff]
    %v440 = vld [vmem:[%s435 + $0x20] sm:$0xff]
    %v441 = vld [vmem:[%s435 + $0x28] sm:$0xff]
    %v442 = vld [vmem:[%s435 + $0x30] sm:$0xff]
    %v443 = vld [vmem:[%s435 + $0x38] sm:$0xff]
    %v444 = vld [vmem:[%s435 + $0x40] sm:$0xff]
    %v445 = vld [vmem:[%s435 + $0x48] sm:$0xff]
    %v446 = vld [vmem:[%s435 + $0x50] sm:$0xff]
    %v447 = vld [vmem:[%s435 + $0x58] sm:$0xff]
    %v448 = vld [vmem:[%s435 + $0x60] sm:$0xff]
    %v449 = vld [vmem:[%s435 + $0x68] sm:$0xff]
    %v450 = vld [vmem:[%s435 + $0x70] sm:$0xff]
    %v451 = vld [vmem:[%s435 + $0x78] sm:$0xff]
    %v454 = vrot.slane %v418, 7
    %v455 = vsel %vm327, %v454, %v417
    %457 = vmatpush.msra.mxu0 %v451
    %458 = vmatpush.msra.mxu0 %v450
    %459 = vmatpush.msra.mxu0 %v449
    %460 = vmatpush.msra.mxu0 %v448
    %461 = vmatpush.msra.mxu0 %v447
    %462 = vmatpush.msra.mxu0 %v446
    %463 = vmatpush.msra.mxu0 %v445
    %464 = vmatpush.msra.mxu0 %v444
    %465 = vmatpush.msra.mxu0 %v443
    %466 = vmatpush.msra.mxu0 %v442
    %467 = vmatpush.msra.mxu0 %v441
    %468 = vmatpush.msra.mxu0 %v440
    %469 = vmatpush.msra.mxu0 %v439
    %470 = vmatpush.msra.mxu0 %v438
    %471 = vmatpush.msra.mxu0 %v437
    %472 = vmatpush.msra.mxu0 %v436
    %473 = vmatmul.f32.gmra.mxu0 %v455
    %v474 = vpop.f32.mrf.mxu0
    %v475 = vadd.f32 0.0, %v474
    %476 = vdwg.mxu0
    %v479 = vrot.slane %v416, 7
    %v480 = vsel %vm327, %v479, %v415
    %482 = vmatpush.msra.mxu0 %v434
    %483 = vmatpush.msra.mxu0 %v433
    %484 = vmatpush.msra.mxu0 %v432
    %485 = vmatpush.msra.mxu0 %v431
    %486 = vmatpush.msra.mxu0 %v430
    %487 = vmatpush.msra.mxu0 %v429
    %488 = vmatpush.msra.mxu0 %v428
    %489 = vmatpush.msra.mxu0 %v427
    %490 = vmatpush.msra.mxu0 %v426
    %491 = vmatpush.msra.mxu0 %v425
    %492 = vmatpush.msra.mxu0 %v424
    %493 = vmatpush.msra.mxu0 %v423
    %494 = vmatpush.msra.mxu0 %v422
    %495 = vmatpush.msra.mxu0 %v421
    %496 = vmatpush.msra.mxu0 %v420
    %497 = vmatpush.msra.mxu0 %v419
    %498 = vmatmul.f32.gmra.mxu0 %v480
    %v499 = vpop.f32.mrf.mxu0
    %v500 = vadd.f32 %v475, %v499
    %501 = vdwg.mxu0
    %v502 = vld [vmem:[%s4] sm:$0x1]
    %v504 = vperm.slane %v502, 0
    %v506 = vadd.f32 %v500, %v504
    %vm507 = vcmask 25600
    %508 = vst.msk [vmem:[#allocation2] sm:$0x3] %vm507, %v506
    // Predicated region
    $region22: #{siamese_forward.1} parent=1 // pred_check
      _
    $region23: #{siamese_forward.1} parent=1 // pred_check_branch
      %510 = sbr.rel (0) target = $region25
    $region24: #{siamese_forward.1} parent=1 // pred_region
      %512 = vsyncadd [#allocation3], 0
      %s514 = sshll.u32 [#allocation2], 4
      %s515 = int_to_ptr.vmem [resolvable:$true] %s514
      %s516 = sshll.u32 %s5, 4
      %s517 = int_to_ptr.hbm [resolvable:$true] %s516
      %519 = dma.vmem_to_hbm [thread:$0]  %s515, 32, %s517, [#allocation3]
    $region25: #{siamese_forward.1} parent=1 // pred_fallthru
      _
    // Predicated region
    $region26: #{siamese_forward.1} parent=1 // pred_check
      _
    $region27: #{siamese_forward.1} parent=1 // pred_check_branch
      %521 = sbr.rel (0) target = $region29
    $region28: #{siamese_forward.1} parent=1 // pred_region
      %523 = dma.done [#allocation3], 32
    $region29: #{siamese_forward.1} parent=1 // pred_fallthru
      _
    %524 = vsyncpa [#allocation3], 1

</llo_original>
